<compile_context>
chip_gen: v7x
topology: tpu7x:2x2x1
jax: 0.10.0
libtpu: 0.0.40
codegen_flags: <defaults>
</compile_context>

<pallas_src>
import jax
import jax.numpy as jnp
from jax.experimental import pallas as pl
from jax.experimental.pallas import tpu as pltpu

_LANE = 128


def _round_up(x, m):
    return ((x + m - 1) // m) * m


def _vmem_budgets():
    """(tile-selection budget, vmem_limit_bytes) sized per TPU generation."""
    try:
        phys = int(getattr(pltpu.get_tpu_info(), "vmem_capacity_bytes", 0))
    except Exception:
        phys = 0
    if phys == 0:
        phys = 64 * 1024 * 1024            # unknown -> assume the smallest (v7x)
    if phys <= 64 * 1024 * 1024:           # v7x-class: 64 MiB physical per core
        return 36 * 1024 * 1024, 48 * 1024 * 1024
    return 56 * 1024 * 1024, 72 * 1024 * 1024   # v5e / v6e: 128 MiB physical


def mlp_kernel(x_ref, w1_ref, b1_ref, w2_ref, b2_ref,
               w3_ref, b3_ref, w4_ref, b4_ref, o_ref):
    cd = w1_ref.dtype  # streaming/compute dtype; accumulation is always f32
    # fc1 + bias + ReLU   (Dropout(p=0.5) == identity in eval mode)
    h = jnp.dot(x_ref[...], w1_ref[...],
                preferred_element_type=jnp.float32) + b1_ref[...]
    h = jnp.maximum(h.astype(cd), 0)   # ReLU in the streaming dtype (bf16 on v6e/v7x)
    # fc2 + bias + ReLU
    h = jnp.dot(h, w2_ref[...],
                preferred_element_type=jnp.float32) + b2_ref[...]
    h = jnp.maximum(h.astype(cd), 0)
    # fc3 + bias + ReLU
    h = jnp.dot(h, w3_ref[...],
                preferred_element_type=jnp.float32) + b3_ref[...]
    h = jnp.maximum(h.astype(cd), 0)
    # fc4 (16 -> 1): w4_row (1,16) contracted against h (tile,16) on the shared
    # 16-dim (q.k^T-style dot_general) -> (1, tile). This lands directly in the
    # lane-dense output row (no (tile,1)->(1,tile) relayout, no masked stores)
    # and avoids an N=1 MXU matvec.
    o_row = jax.lax.dot_general(
        w4_ref[...], h,
        dimension_numbers=(((1,), (1,)), ((), ())),
        preferred_element_type=jnp.float32)
    o_row = jax.nn.sigmoid(o_row + b4_ref[...])          # f32 epilogue (safe on v5e)
    o_ref[...] = o_row.reshape(o_ref.shape).astype(o_ref.dtype)


def modelo_nn_forward(x, params, *, tile_b=None, compute_dtype=jnp.bfloat16):
    """x: (B, input_size) float32.
    params: (in,out) weights "w1..w4" and (1,out) biases "b1..b4" (f32).
    compute_dtype: dtype used for streaming x / weights into the MXU; the
    accumulation is always f32 (biases and sigmoid stay f32)."""
    B, F = x.shape
    cd = jnp.dtype(compute_dtype)

    # Streamed operands. fc4's weight is reshaped to a (1, 16) row for the
    # transposed dot_general in the kernel; biases remain f32.
    w1 = params["w1"].astype(cd)
    w2 = params["w2"].astype(cd)
    w3 = params["w3"].astype(cd)
    w4 = params["w4"].reshape(1, -1).astype(cd)          # (16,1) -> (1,16)
    b1 = params["b1"].astype(jnp.float32)
    b2 = params["b2"].astype(jnp.float32)
    b3 = params["b3"].astype(jnp.float32)
    b4 = params["b4"].astype(jnp.float32).reshape(1, 1)
    consts = [w1, b1, w2, b2, w3, b3, w4, b4]

    budget, vmem_limit = _vmem_budgets()
    f_pad = _round_up(F, _LANE)

    def vmem_need(tb):
        # Lane-padding aware: x/activations pad their last dim to 128 lanes.
        x_bytes = 2 * tb * f_pad * cd.itemsize                      # double-buffered x tile
        out_bytes = 2 * 8 * _round_up(tb, _LANE) * 4                # lane-dense (1,1,tile) f32 row
        w_bytes = 2 * sum(_round_up(a.shape[0], 8) * _round_up(a.shape[-1], _LANE)
                          * a.dtype.itemsize for a in consts)       # double-buffered consts
        act_bytes = tb * _LANE * (3 * 4 + 2 * cd.itemsize)          # live hidden activations
        return x_bytes + out_bytes + w_bytes + act_bytes

    # ---- F-aware batch tile: ~1 MiB of x per grid step, bounded by the
    # ---- per-generation VMEM budget; keep >= 2 steps so both v7x TCs get work.
    if tile_b is None:
        tile = _round_up(max((1 << 20) // (F * cd.itemsize), 512), 512)
    else:
        tile = _round_up(max(int(tile_b), 8), 8)
    tile = min(tile, _round_up(B, 8))                # don't pad small batches to a huge tile
    if B >= 2048:
        tile = min(tile, _round_up(-(-B // 2), 512))  # >= 2 'parallel' grid steps
    while tile > 512 and vmem_need(tile) > budget:
        tile = max(512, _round_up(tile // 2, 128))
    # TODO(synk): for very large input_size, mark the constant weight specs with
    # pipeline_mode=pl.Buffered(1) (w1 is the only F-dependent operand) and add a
    # K-tiled 'arbitrary' grid axis with an f32 VMEM accumulator.

    num_tiles = -(-B // tile)
    B_pad = num_tiles * tile

    x_p = x.astype(cd)
    if B_pad != B:
        x_p = jnp.pad(x_p, ((0, B_pad - B), (0, 0)))   # zero rows, sliced off below

    def full(a):
        return pl.BlockSpec(a.shape, lambda i: (0,) * a.ndim)

    flops = 2 * B_pad * (F * 64 + 64 * 32 + 32 * 16 + 16)
    bytes_accessed = (B_pad * F * cd.itemsize
                      + sum(int(a.size) * a.dtype.itemsize for a in consts)
                      + B_pad * 4)

    out = pl.pallas_call(
        mlp_kernel,
        out_shape=jax.ShapeDtypeStruct((num_tiles, 1, tile), jnp.float32),
        grid_spec=pltpu.PrefetchScalarGridSpec(
            num_scalar_prefetch=0,
            grid=(num_tiles,),
            in_specs=[pl.BlockSpec((tile, F), lambda i: (i, 0))]     # x tile
                     + [full(a) for a in consts],                    # weights / biases
            # lane-dense output: one (1, 1, tile) row per grid step (batch on lanes)
            out_specs=pl.BlockSpec((1, 1, tile), lambda i: (i, 0, 0)),
        ),
        compiler_params=pltpu.CompilerParams(
            dimension_semantics=("parallel",),
            vmem_limit_bytes=int(vmem_limit),
        ),
        cost_estimate=pl.CostEstimate(
            flops=int(flops),
            transcendentals=2 * B_pad,        # sigmoid = exp + reciprocal per output
            bytes_accessed=int(bytes_accessed),
        ),
    )(x_p, *consts)

    return out.reshape(B_pad, 1)[:B]


def init_params(key, input_size):
    """Deterministic synthetic init matching nn.Linear shapes, pre-transposed to (in, out)."""
    dims = [(input_size, 64), (64, 32), (32, 16), (16, 1)]
    params = {}
    for idx, (din, dout) in enumerate(dims, start=1):
        key, kw, kb = jax.random.split(key, 3)
        bound = 1.0 / (din ** 0.5)   # same scale as PyTorch's default uniform init
        params[f"w{idx}"] = jax.random.uniform(
            kw, (din, dout), jnp.float32, minval=-bound, maxval=bound)
        params[f"b{idx}"] = jax.random.uniform(
            kb, (1, dout), jnp.float32, minval=-bound, maxval=bound)
    return params


if __name__ == "__main__":
    key = jax.random.PRNGKey(0)
    k_x, k_p = jax.random.split(key)

    # small shapes; batch deliberately not 8/128-aligned to exercise cdiv + pad
    batch, input_size = 300, 32
    x = jax.random.normal(k_x, (batch, input_size), jnp.float32)
    params = init_params(k_p, input_size)

    # plain-JAX reference (eval-mode dropout == identity)
    h = jnp.maximum(x @ params["w1"] + params["b1"], 0.0)
    h = jnp.maximum(h @ params["w2"] + params["b2"], 0.0)
    h = jnp.maximum(h @ params["w3"] + params["b3"], 0.0)
    ref = jax.nn.sigmoid(h @ params["w4"] + params["b4"])

    # default path: bf16 streaming (f32 accumulation), auto batch tile
    out = modelo_nn_forward(x, params)
    jax.block_until_ready(out)
    assert out.shape == (batch, 1)
    assert jnp.allclose(out, ref, atol=5e-2), "mismatch vs reference (bf16 streaming)"

    # f32 streaming path (tight tolerance)
    out_f32 = modelo_nn_forward(x, params, compute_dtype=jnp.float32)
    jax.block_until_ready(out_f32)
    assert jnp.allclose(out_f32, ref, atol=1e-5), "mismatch vs reference (f32)"

    # multi-tile path: force a small tile so the batch spans several grid steps
    out_tiled = modelo_nn_forward(x, params, tile_b=128)
    jax.block_until_ready(out_tiled)
    assert out_tiled.shape == (batch, 1)
    assert jnp.allclose(out_tiled, ref, atol=5e-2), "mismatch vs reference (multi-tile)"

    print("KERNEL_OK")
</pallas_src>

<mosaic_0001>
module attributes {stable_mosaic.version = 11 : i64} {
  func.func @mlp_kernel(%arg0: i32, %arg1: memref<304x32xbf16, #tpu.memory_space<vmem>>, %arg2: memref<32x64xbf16, #tpu.memory_space<vmem>>, %arg3: memref<1x64xf32, #tpu.memory_space<vmem>>, %arg4: memref<64x32xbf16, #tpu.memory_space<vmem>>, %arg5: memref<1x32xf32, #tpu.memory_space<vmem>>, %arg6: memref<32x16xbf16, #tpu.memory_space<vmem>>, %arg7: memref<1x16xf32, #tpu.memory_space<vmem>>, %arg8: memref<1x16xbf16, #tpu.memory_space<vmem>>, %arg9: memref<1x1xf32, #tpu.memory_space<vmem>>, %arg10: memref<1x1x304xf32, #tpu.memory_space<vmem>>) attributes {dimension_semantics = [#tpu.dimension_semantics<parallel>], iteration_bounds = array<i64: 1>, scalar_prefetch = 0 : i64, scratch_operands = 0 : i64, tpu.core_type = #tpu.core_type<tc>, window_params = [{transform_indices = @transform_0, window_bounds = array<i64: 304, 32>}, {pipeline_mode = #tpu.pipeline_mode<synchronous>, transform_indices = @transform_1, window_bounds = array<i64: 32, 64>}, {pipeline_mode = #tpu.pipeline_mode<synchronous>, transform_indices = @transform_2, window_bounds = array<i64: 1, 64>}, {pipeline_mode = #tpu.pipeline_mode<synchronous>, transform_indices = @transform_3, window_bounds = array<i64: 64, 32>}, {pipeline_mode = #tpu.pipeline_mode<synchronous>, transform_indices = @transform_4, window_bounds = array<i64: 1, 32>}, {pipeline_mode = #tpu.pipeline_mode<synchronous>, transform_indices = @transform_5, window_bounds = array<i64: 32, 16>}, {pipeline_mode = #tpu.pipeline_mode<synchronous>, transform_indices = @transform_6, window_bounds = array<i64: 1, 16>}, {pipeline_mode = #tpu.pipeline_mode<synchronous>, transform_indices = @transform_7, window_bounds = array<i64: 1, 16>}, {pipeline_mode = #tpu.pipeline_mode<synchronous>, transform_indices = @transform_8, window_bounds = array<i64: 1, 1>}, {transform_indices = @transform_9, window_bounds = array<i64: 1, 1, 304>}]} {
    %c0 = arith.constant 0 : index
    %c0_0 = arith.constant 0 : index
    %0 = vector.load %arg1[%c0, %c0_0] : memref<304x32xbf16, #tpu.memory_space<vmem>>, vector<304x32xbf16>
    %c0_1 = arith.constant 0 : index
    %c0_2 = arith.constant 0 : index
    %1 = vector.load %arg2[%c0_1, %c0_2] : memref<32x64xbf16, #tpu.memory_space<vmem>>, vector<32x64xbf16>
    %cst = arith.constant dense<0.000000e+00> : vector<304x64xf32>
    %2 = tpu.matmul %0, %1, %cst {dimension_numbers = #tpu.dot_dimension_numbers<[1], [0], [0], [1], [0, 0, 1, 1], [], []>} : vector<304x32xbf16>, vector<32x64xbf16>, vector<304x64xf32> -> vector<304x64xf32>
    %c0_3 = arith.constant 0 : index
    %c0_4 = arith.constant 0 : index
    %3 = vector.load %arg3[%c0_3, %c0_4] : memref<1x64xf32, #tpu.memory_space<vmem>>, vector<1x64xf32>
    %4 = vector.broadcast %3 : vector<1x64xf32> to vector<304x64xf32>
    %5 = arith.addf %2, %4 : vector<304x64xf32>
    %6 = arith.truncf %5 : vector<304x64xf32> to vector<304x64xbf16>
    %cst_5 = arith.constant 0.000000e+00 : bf16
    %7 = vector.broadcast %cst_5 : bf16 to vector<304x64xbf16>
    %8 = arith.maximumf %6, %7 : vector<304x64xbf16>
    %c0_6 = arith.constant 0 : index
    %c0_7 = arith.constant 0 : index
    %9 = vector.load %arg4[%c0_6, %c0_7] : memref<64x32xbf16, #tpu.memory_space<vmem>>, vector<64x32xbf16>
    %cst_8 = arith.constant dense<0.000000e+00> : vector<304x32xf32>
    %10 = tpu.matmul %8, %9, %cst_8 {dimension_numbers = #tpu.dot_dimension_numbers<[1], [0], [0], [1], [0, 0, 1, 1], [], []>} : vector<304x64xbf16>, vector<64x32xbf16>, vector<304x32xf32> -> vector<304x32xf32>
    %c0_9 = arith.constant 0 : index
    %c0_10 = arith.constant 0 : index
    %11 = vector.load %arg5[%c0_9, %c0_10] : memref<1x32xf32, #tpu.memory_space<vmem>>, vector<1x32xf32>
    %12 = vector.broadcast %11 : vector<1x32xf32> to vector<304x32xf32>
    %13 = arith.addf %10, %12 : vector<304x32xf32>
    %14 = arith.truncf %13 : vector<304x32xf32> to vector<304x32xbf16>
    %cst_11 = arith.constant 0.000000e+00 : bf16
    %15 = vector.broadcast %cst_11 : bf16 to vector<304x32xbf16>
    %16 = arith.maximumf %14, %15 : vector<304x32xbf16>
    %c0_12 = arith.constant 0 : index
    %c0_13 = arith.constant 0 : index
    %17 = vector.load %arg6[%c0_12, %c0_13] : memref<32x16xbf16, #tpu.memory_space<vmem>>, vector<32x16xbf16>
    %cst_14 = arith.constant dense<0.000000e+00> : vector<304x16xf32>
    %18 = tpu.matmul %16, %17, %cst_14 {dimension_numbers = #tpu.dot_dimension_numbers<[1], [0], [0], [1], [0, 0, 1, 1], [], []>} : vector<304x32xbf16>, vector<32x16xbf16>, vector<304x16xf32> -> vector<304x16xf32>
    %c0_15 = arith.constant 0 : index
    %c0_16 = arith.constant 0 : index
    %19 = vector.load %arg7[%c0_15, %c0_16] : memref<1x16xf32, #tpu.memory_space<vmem>>, vector<1x16xf32>
    %20 = vector.broadcast %19 : vector<1x16xf32> to vector<304x16xf32>
    %21 = arith.addf %18, %20 : vector<304x16xf32>
    %22 = arith.truncf %21 : vector<304x16xf32> to vector<304x16xbf16>
    %cst_17 = arith.constant 0.000000e+00 : bf16
    %23 = vector.broadcast %cst_17 : bf16 to vector<304x16xbf16>
    %24 = arith.maximumf %22, %23 : vector<304x16xbf16>
    %c0_18 = arith.constant 0 : index
    %c0_19 = arith.constant 0 : index
    %25 = vector.load %arg8[%c0_18, %c0_19] : memref<1x16xbf16, #tpu.memory_space<vmem>>, vector<1x16xbf16>
    %cst_20 = arith.constant dense<0.000000e+00> : vector<1x304xf32>
    %26 = tpu.matmul %25, %24, %cst_20 {dimension_numbers = #tpu.dot_dimension_numbers<[1], [1], [0], [0], [0, 0, 1, 0], [], []>} : vector<1x16xbf16>, vector<304x16xbf16>, vector<1x304xf32> -> vector<1x304xf32>
    %c0_21 = arith.constant 0 : index
    %c0_22 = arith.constant 0 : index
    %27 = vector.load %arg9[%c0_21, %c0_22] : memref<1x1xf32, #tpu.memory_space<vmem>>, vector<1x1xf32>
    %28 = vector.broadcast %27 : vector<1x1xf32> to vector<1x304xf32>
    %29 = arith.addf %26, %28 : vector<1x304xf32>
    %30 = arith.negf %29 : vector<1x304xf32>
    %31 = math.exp %30 : vector<1x304xf32>
    %cst_23 = arith.constant 1.000000e+00 : f32
    %32 = vector.broadcast %cst_23 : f32 to vector<1x304xf32>
    %33 = arith.addf %32, %31 : vector<1x304xf32>
    %34 = arith.divf %32, %33 : vector<1x304xf32>
    %35 = vector.shape_cast %34 : vector<1x304xf32> to vector<1x1x304xf32>
    %c0_24 = arith.constant 0 : index
    %c0_25 = arith.constant 0 : index
    %c0_26 = arith.constant 0 : index
    %36 = vector.load %arg10[%c0_24, %c0_25, %c0_26] : memref<1x1x304xf32, #tpu.memory_space<vmem>>, vector<1x1x304xf32>
    tpu.vector_store %arg10[%c0_24, %c0_25, %c0_26], %35 {strides = array<i32>} : memref<1x1x304xf32, #tpu.memory_space<vmem>>, vector<1x1x304xf32>,
    return
  }
  func.func @transform_0(%arg0: i32) -> (i32, i32) {
    %c0_i32 = arith.constant 0 : i32
    %c0_i32_0 = arith.constant 0 : i32
    return %arg0, %c0_i32 : i32, i32
  }
  func.func @transform_1(%arg0: i32) -> (i32, i32) {
    %c0_i32 = arith.constant 0 : i32
    %c0_i32_0 = arith.constant 0 : i32
    %c0_i32_1 = arith.constant 0 : i32
    return %c0_i32, %c0_i32_0 : i32, i32
  }
  func.func @transform_2(%arg0: i32) -> (i32, i32) {
    %c0_i32 = arith.constant 0 : i32
    %c0_i32_0 = arith.constant 0 : i32
    %c0_i32_1 = arith.constant 0 : i32
    return %c0_i32, %c0_i32_0 : i32, i32
  }
  func.func @transform_3(%arg0: i32) -> (i32, i32) {
    %c0_i32 = arith.constant 0 : i32
    %c0_i32_0 = arith.constant 0 : i32
    %c0_i32_1 = arith.constant 0 : i32
    return %c0_i32, %c0_i32_0 : i32, i32
  }
  func.func @transform_4(%arg0: i32) -> (i32, i32) {
    %c0_i32 = arith.constant 0 : i32
    %c0_i32_0 = arith.constant 0 : i32
    %c0_i32_1 = arith.constant 0 : i32
    return %c0_i32, %c0_i32_0 : i32, i32
  }
  func.func @transform_5(%arg0: i32) -> (i32, i32) {
    %c0_i32 = arith.constant 0 : i32
    %c0_i32_0 = arith.constant 0 : i32
    %c0_i32_1 = arith.constant 0 : i32
    return %c0_i32, %c0_i32_0 : i32, i32
  }
  func.func @transform_6(%arg0: i32) -> (i32, i32) {
    %c0_i32 = arith.constant 0 : i32
    %c0_i32_0 = arith.constant 0 : i32
    %c0_i32_1 = arith.constant 0 : i32
    return %c0_i32, %c0_i32_0 : i32, i32
  }
  func.func @transform_7(%arg0: i32) -> (i32, i32) {
    %c0_i32 = arith.constant 0 : i32
    %c0_i32_0 = arith.constant 0 : i32
    %c0_i32_1 = arith.constant 0 : i32
    return %c0_i32, %c0_i32_0 : i32, i32
  }
  func.func @transform_8(%arg0: i32) -> (i32, i32) {
    %c0_i32 = arith.constant 0 : i32
    %c0_i32_0 = arith.constant 0 : i32
    %c0_i32_1 = arith.constant 0 : i32
    return %c0_i32, %c0_i32_0 : i32, i32
  }
  func.func @transform_9(%arg0: i32) -> (i32, i32, i32) {
    %c0_i32 = arith.constant 0 : i32
    %c0_i32_0 = arith.constant 0 : i32
    %c0_i32_1 = arith.constant 0 : i32
    return %arg0, %c0_i32, %c0_i32_0 : i32, i32, i32
  }
}

</mosaic_0001>

<llo_original>
// kernel: tpu_custom_call.1
$region0: #{tpu_custom_call.1}
  #allocation0 [shape = 'u32[]', space=smem, size = 0x4, offset = 0x4, fixed_abs, tag = 'smem constant byte address 0x4 - core index']
  #allocation1 [shape = 'u32[144,128]{1,0:T(1,128)}', space=vmem, size = 0x12000, scoped, tag = 'internal scratch']
  #allocation2 [shape = 'f32[1,1]{1,0:T(1,128)S(1)}', space=vmem, size = 0x200, scoped, tag = 'scoped memory for tpu_custom_call.1']
  %s0 = inlined_call_operand.vmem [shape: bf16[304,32], index: 0, kind: input, shape index: {}]
  %s1 = inlined_call_operand.vmem [shape: bf16[32,64], index: 1, kind: input, shape index: {}]
  %s2 = inlined_call_operand.vmem [shape: f32[1,64], index: 2, kind: input, shape index: {}]
  %s3 = inlined_call_operand.vmem [shape: bf16[64,32], index: 3, kind: input, shape index: {}]
  %s4 = inlined_call_operand.vmem [shape: f32[1,32], index: 4, kind: input, shape index: {}]
  %s5 = inlined_call_operand.vmem [shape: bf16[32,16], index: 5, kind: input, shape index: {}]
  %s6 = inlined_call_operand.vmem [shape: f32[1,16], index: 6, kind: input, shape index: {}]
  %s7 = inlined_call_operand.vmem [shape: bf16[1,16], index: 7, kind: input, shape index: {}]
  %s8 = inlined_call_operand.<no memory space> [shape: f32[1,1], index: 8, kind: input, shape index: {}]
  %s9 = inlined_call_operand.hbm [shape: f32[1,1,304], index: 9, kind: output, shape index: {}]
  %s10 = sld [smem:[#allocation0]]
  $region46: #{tpu_custom_call.1} parent=0
    _
  %s12 = ssub.s32 1, %s10
  %s13 = scalar_select 0, %s12, %s10
  %v14 = vstv %s8
  %15 = vst [vmem:[#allocation2] sm:$0x1] %v14
  $region1: #{tpu_custom_call.1} parent=0
    #allocation3 [shape = 'u8[1536]{0}', space=vmem, size = 0x800, scoped, tag = 'output window, operand 0, single buffered']
    #allocation4 [shape = 's32[1]{0}', space=sflag, size = 0x4, scoped, tag = 'scoped memory for tpu_custom_call.1']
    %16 = vsyncpa [#allocation4], 0
    // Predicated region
    $region2: #{tpu_custom_call.1} parent=1 // pred_check
      _
    $region3: #{tpu_custom_call.1} parent=1 // pred_check_branch
      %18 = sbr.rel (0) target = $region5
    $region4: #{tpu_custom_call.1} parent=1 // pred_region
      _
    $region5: #{tpu_custom_call.1} parent=1 // pred_fallthru
      _
    // Predicated region
    $region6: #{tpu_custom_call.1} parent=1 // pred_check
      _
    $region7: #{tpu_custom_call.1} parent=1 // pred_check_branch
      %20 = sbr.rel (0) target = $region9
    $region8: #{tpu_custom_call.1} parent=1 // pred_region
      _
    $region9: #{tpu_custom_call.1} parent=1 // pred_fallthru
      _
    // Predicated region
    $region10: #{tpu_custom_call.1} parent=1 // pred_check
      _
    $region11: #{tpu_custom_call.1} parent=1 // pred_check_branch
      %22 = sbr.rel (0) target = $region13
    $region12: #{tpu_custom_call.1} parent=1 // pred_region
      _
    $region13: #{tpu_custom_call.1} parent=1 // pred_fallthru
      _
    // Predicated region
    $region14: #{tpu_custom_call.1} parent=1 // pred_check
      _
    $region15: #{tpu_custom_call.1} parent=1 // pred_check_branch
      %24 = sbr.rel (0) target = $region17
    $region16: #{tpu_custom_call.1} parent=1 // pred_region
      _
    $region17: #{tpu_custom_call.1} parent=1 // pred_fallthru
      _
    // Predicated region
    $region18: #{tpu_custom_call.1} parent=1 // pred_check
      _
    $region19: #{tpu_custom_call.1} parent=1 // pred_check_branch
      %26 = sbr.rel (0) target = $region21
    $region20: #{tpu_custom_call.1} parent=1 // pred_region
      _
    $region21: #{tpu_custom_call.1} parent=1 // pred_fallthru
      _
    // Predicated region
    $region22: #{tpu_custom_call.1} parent=1 // pred_check
      _
    $region23: #{tpu_custom_call.1} parent=1 // pred_check_branch
      %28 = sbr.rel (0) target = $region25
    $region24: #{tpu_custom_call.1} parent=1 // pred_region
      _
    $region25: #{tpu_custom_call.1} parent=1 // pred_fallthru
      _
    // Predicated region
    $region26: #{tpu_custom_call.1} parent=1 // pred_check
      _
    $region27: #{tpu_custom_call.1} parent=1 // pred_check_branch
      %30 = sbr.rel (0) target = $region29
    $region28: #{tpu_custom_call.1} parent=1 // pred_region
      _
    $region29: #{tpu_custom_call.1} parent=1 // pred_fallthru
      _
    // Predicated region
    $region30: #{tpu_custom_call.1} parent=1 // pred_check
      _
    $region31: #{tpu_custom_call.1} parent=1 // pred_check_branch
      %32 = sbr.rel (0) target = $region33
    $region32: #{tpu_custom_call.1} parent=1 // pred_region
      _
    $region33: #{tpu_custom_call.1} parent=1 // pred_fallthru
      _
    // Predicated region
    $region34: #{tpu_custom_call.1} parent=1 // pred_check
      _
    $region35: #{tpu_custom_call.1} parent=1 // pred_check_branch
      %34 = sbr.rel (0) target = $region37
    $region36: #{tpu_custom_call.1} parent=1 // pred_region
      _
    $region37: #{tpu_custom_call.1} parent=1 // pred_fallthru
      _
    %v36 = vld [vmem:[%s0] sm:$0xf]
    %v37 = vld [vmem:[%s0 + $0x4] sm:$0xf]
    %v38 = vld [vmem:[%s0 + $0x8] sm:$0xf]
    %v39 = vld [vmem:[%s0 + $0xc] sm:$0xf]
    %v40 = vld [vmem:[%s0 + $0x10] sm:$0xf]
    %v41 = vld [vmem:[%s0 + $0x14] sm:$0xf]
    %v42 = vld [vmem:[%s0 + $0x18] sm:$0xf]
    %v43 = vld [vmem:[%s0 + $0x1c] sm:$0xf]
    %v44 = vld [vmem:[%s0 + $0x20] sm:$0xf]
    %v45 = vld [vmem:[%s0 + $0x24] sm:$0xf]
    %v46 = vld [vmem:[%s0 + $0x28] sm:$0xf]
    %v47 = vld [vmem:[%s0 + $0x2c] sm:$0xf]
    %v48 = vld [vmem:[%s0 + $0x30] sm:$0xf]
    %v49 = vld [vmem:[%s0 + $0x34] sm:$0xf]
    %v50 = vld [vmem:[%s0 + $0x38] sm:$0xf]
    %v51 = vld [vmem:[%s0 + $0x3c] sm:$0xf]
    %v52 = vld [vmem:[%s0 + $0x40] sm:$0xf]
    %v53 = vld [vmem:[%s0 + $0x44] sm:$0xf]
    %v54 = vld [vmem:[%s0 + $0x48] sm:$0xf]
    %v55 = vld [vmem:[%s0 + $0x4c] sm:$0xf]
    %v56 = vld [vmem:[%s0 + $0x50] sm:$0xf]
    %v57 = vld [vmem:[%s0 + $0x54] sm:$0xf]
    %v58 = vld [vmem:[%s0 + $0x58] sm:$0xf]
    %v59 = vld [vmem:[%s0 + $0x5c] sm:$0xf]
    %v60 = vld [vmem:[%s0 + $0x60] sm:$0xf]
    %v61 = vld [vmem:[%s0 + $0x64] sm:$0xf]
    %v62 = vld [vmem:[%s0 + $0x68] sm:$0xf]
    %v63 = vld [vmem:[%s0 + $0x6c] sm:$0xf]
    %v64 = vld [vmem:[%s0 + $0x70] sm:$0xf]
    %v65 = vld [vmem:[%s0 + $0x74] sm:$0xf]
    %v66 = vld [vmem:[%s0 + $0x78] sm:$0xf]
    %v67 = vld [vmem:[%s0 + $0x7c] sm:$0xf]
    %v68 = vld [vmem:[%s0 + $0x80] sm:$0xf]
    %v69 = vld [vmem:[%s0 + $0x84] sm:$0xf]
    %v70 = vld [vmem:[%s0 + $0x88] sm:$0xf]
    %v71 = vld [vmem:[%s0 + $0x8c] sm:$0xf]
    %v72 = vld [vmem:[%s0 + $0x90] sm:$0xf]
    %v73 = vld [vmem:[%s0 + $0x94] sm:$0xf]
    %v74 = vld [vmem:[%s1] sm:$0xf]
    %v75 = vld [vmem:[%s1 + $0x4] sm:$0xf]
    %v76 = vld [vmem:[%s1 + $0x8] sm:$0xf]
    %v77 = vld [vmem:[%s1 + $0xc] sm:$0xf]
    %v78 = vld [vmem:[%s2] sm:$0x1]
    %v80 = vlaneseq
    %v81 = vshrl.u32 %v80, 7
    %v82 = vsub.s32 0, %v81
    %v83 = vrot.slane %v78, %v82
    %v123 = vunpack.c.l.b16 %v36
    %v124 = vunpack.c.l.b16 %v37
    %v125 = vunpack.c.l.b16 %v38
    %v126 = vunpack.c.l.b16 %v39
    %v127 = vunpack.c.l.b16 %v40
    %v128 = vunpack.c.l.b16 %v41
    %v129 = vunpack.c.l.b16 %v42
    %v130 = vunpack.c.l.b16 %v43
    %v131 = vunpack.c.l.b16 %v44
    %v132 = vunpack.c.l.b16 %v45
    %v133 = vunpack.c.l.b16 %v46
    %v134 = vunpack.c.l.b16 %v47
    %v135 = vunpack.c.l.b16 %v48
    %v136 = vunpack.c.l.b16 %v49
    %v137 = vunpack.c.l.b16 %v50
    %v138 = vunpack.c.l.b16 %v51
    %v139 = vunpack.c.l.b16 %v52
    %v140 = vunpack.c.l.b16 %v53
    %v141 = vunpack.c.l.b16 %v54
    %v142 = vunpack.c.l.b16 %v55
    %v143 = vunpack.c.l.b16 %v56
    %v144 = vunpack.c.l.b16 %v57
    %v145 = vunpack.c.l.b16 %v58
    %v146 = vunpack.c.l.b16 %v59
    %v147 = vunpack.c.l.b16 %v60
    %v148 = vunpack.c.l.b16 %v61
    %v149 = vunpack.c.l.b16 %v62
    %v150 = vunpack.c.l.b16 %v63
    %v151 = vunpack.c.l.b16 %v64
    %v152 = vunpack.c.l.b16 %v65
    %v153 = vunpack.c.l.b16 %v66
    %v154 = vunpack.c.l.b16 %v67
    %v155 = vunpack.c.l.b16 %v68
    %v156 = vunpack.c.l.b16 %v69
    %v157 = vunpack.c.l.b16 %v70
    %v158 = vunpack.c.l.b16 %v71
    %v159 = vunpack.c.l.b16 %v72
    %v160 = vunpack.c.l.b16 %v73
    %v161 = vpack.c.b16 %v124, %v123
    %v162 = vpack.c.b16 %v126, %v125
    %v163 = vpack.c.b16 %v128, %v127
    %v164 = vpack.c.b16 %v130, %v129
    %v165 = vpack.c.b16 %v132, %v131
    %v166 = vpack.c.b16 %v134, %v133
    %v167 = vpack.c.b16 %v136, %v135
    %v168 = vpack.c.b16 %v138, %v137
    %v169 = vpack.c.b16 %v140, %v139
    %v170 = vpack.c.b16 %v142, %v141
    %v171 = vpack.c.b16 %v144, %v143
    %v172 = vpack.c.b16 %v146, %v145
    %v173 = vpack.c.b16 %v148, %v147
    %v174 = vpack.c.b16 %v150, %v149
    %v175 = vpack.c.b16 %v152, %v151
    %v176 = vpack.c.b16 %v154, %v153
    %v177 = vpack.c.b16 %v156, %v155
    %v178 = vpack.c.b16 %v158, %v157
    %v179 = vpack.c.b16 %v160, %v159
    %v184 = vunpack.c.l.b16 %v74
    %v185 = vunpack.c.l.b16 %v75
    %v186 = vunpack.c.l.b16 %v76
    %v187 = vunpack.c.l.b16 %v77
    %v188 = vpack.c.b16 %v185, %v184
    %v189 = vpack.c.b16 %v187, %v186
    %vm192 = vcmask 261120
    %v194 = vsel %vm192, %v161, 0
    %v197 = vsel %vm192, %v162, 0
    %v200 = vsel %vm192, %v163, 0
    %v203 = vsel %vm192, %v164, 0
    %v206 = vsel %vm192, %v165, 0
    %v209 = vsel %vm192, %v166, 0
    %v212 = vsel %vm192, %v167, 0
    %v215 = vsel %vm192, %v168, 0
    %v218 = vsel %vm192, %v169, 0
    %v221 = vsel %vm192, %v170, 0
    %v224 = vsel %vm192, %v171, 0
    %v227 = vsel %vm192, %v172, 0
    %v230 = vsel %vm192, %v173, 0
    %v233 = vsel %vm192, %v174, 0
    %v236 = vsel %vm192, %v175, 0
    %v239 = vsel %vm192, %v176, 0
    %v242 = vsel %vm192, %v177, 0
    %v245 = vsel %vm192, %v178, 0
    %v248 = vsel %vm192, %v179, 0
    %250 = vmatprep.subr.bf16.mxu0 0
    %251 = vmatpush1.bf16.msra.mxu0 %v188
    %252 = vmatprep.subr.bf16.mxu0 0
    %253 = vmatpush1.bf16.msra.mxu0 %v189
    %254 = vmatprep.subr.bf16.mxu0 0
    %255 = vmatpush1.bf16.msra.mxu0 0
    %256 = vmatprep.subr.bf16.mxu0 0
    %257 = vmatpush1.bf16.msra.mxu0 0
    %258 = vmatprep.subr.bf16.mxu0 0
    %259 = vmatpush1.bf16.msra.mxu0 0
    %260 = vmatprep.subr.bf16.mxu0 0
    %261 = vmatpush1.bf16.msra.mxu0 0
    %262 = vmatprep.subr.bf16.mxu0 0
    %263 = vmatpush1.bf16.msra.mxu0 0
    %264 = vmatprep.subr.bf16.mxu0 0
    %265 = vmatpush1.bf16.msra.mxu0 0
    %266 = vmatprep.subr.bf16.mxu0 0
    %267 = vmatpush1.bf16.msra.mxu0 0
    %268 = vmatprep.subr.bf16.mxu0 0
    %269 = vmatpush1.bf16.msra.mxu0 0
    %270 = vmatprep.subr.bf16.mxu0 0
    %271 = vmatpush1.bf16.msra.mxu0 0
    %272 = vmatprep.subr.bf16.mxu0 0
    %273 = vmatpush1.bf16.msra.mxu0 0
    %274 = vmatprep.subr.bf16.mxu0 0
    %275 = vmatpush1.bf16.msra.mxu0 0
    %276 = vmatprep.subr.bf16.mxu0 0
    %277 = vmatpush1.bf16.msra.mxu0 0
    %278 = vmatprep.subr.bf16.mxu0 0
    %279 = vmatpush1.bf16.msra.mxu0 0
    %280 = vmatprep.subr.bf16.mxu0 0
    %281 = vmatpush1.bf16.msra.mxu0 0
    %282 = vmatprep.mubr.bf16.mxu0 0
    %283 = vmatmul.mubr.bf16.gmra.mrb[0].mxu0 %v194
    %v284 = vpop.f32.mrb[0].mxu0
    %v285 = vadd.f32 %v83, %v284
    %v286 = vpop.f32.mrb[0].mxu0
    %v287 = vpop.f32.mrb[0].mxu0
    %v288 = vadd.f32 %v83, %v287
    %v289 = vpop.f32.mrb[0].mxu0
    %290 = vmatprep.mubr.bf16.mxu0 0
    %291 = vmatmul.mubr.bf16.gmra.mrb[0].mxu0 %v197
    %v292 = vpop.f32.mrb[0].mxu0
    %v293 = vadd.f32 %v83, %v292
    %v294 = vpop.f32.mrb[0].mxu0
    %v295 = vpop.f32.mrb[0].mxu0
    %v296 = vadd.f32 %v83, %v295
    %v297 = vpop.f32.mrb[0].mxu0
    %298 = vmatprep.mubr.bf16.mxu0 0
    %299 = vmatmul.mubr.bf16.gmra.mrb[0].mxu0 %v200
    %v300 = vpop.f32.mrb[0].mxu0
    %v301 = vadd.f32 %v83, %v300
    %v302 = vpop.f32.mrb[0].mxu0
    %v303 = vpop.f32.mrb[0].mxu0
    %v304 = vadd.f32 %v83, %v303
    %v305 = vpop.f32.mrb[0].mxu0
    %306 = vmatprep.mubr.bf16.mxu0 0
    %307 = vmatmul.mubr.bf16.gmra.mrb[0].mxu0 %v203
    %v308 = vpop.f32.mrb[0].mxu0
    %v309 = vadd.f32 %v83, %v308
    %v310 = vpop.f32.mrb[0].mxu0
    %v311 = vpop.f32.mrb[0].mxu0
    %v312 = vadd.f32 %v83, %v311
    %v313 = vpop.f32.mrb[0].mxu0
    %314 = vmatprep.mubr.bf16.mxu0 0
    %315 = vmatmul.mubr.bf16.gmra.mrb[0].mxu0 %v206
    %v316 = vpop.f32.mrb[0].mxu0
    %v317 = vadd.f32 %v83, %v316
    %v318 = vpop.f32.mrb[0].mxu0
    %v319 = vpop.f32.mrb[0].mxu0
    %v320 = vadd.f32 %v83, %v319
    %v321 = vpop.f32.mrb[0].mxu0
    %322 = vmatprep.mubr.bf16.mxu0 0
    %323 = vmatmul.mubr.bf16.gmra.mrb[0].mxu0 %v209
    %v324 = vpop.f32.mrb[0].mxu0
    %v325 = vadd.f32 %v83, %v324
    %v326 = vpop.f32.mrb[0].mxu0
    %v327 = vpop.f32.mrb[0].mxu0
    %v328 = vadd.f32 %v83, %v327
    %v329 = vpop.f32.mrb[0].mxu0
    %330 = vmatprep.mubr.bf16.mxu0 0
    %331 = vmatmul.mubr.bf16.gmra.mrb[0].mxu0 %v212
    %v332 = vpop.f32.mrb[0].mxu0
    %v333 = vadd.f32 %v83, %v332
    %v334 = vpop.f32.mrb[0].mxu0
    %v335 = vpop.f32.mrb[0].mxu0
    %v336 = vadd.f32 %v83, %v335
    %v337 = vpop.f32.mrb[0].mxu0
    %338 = vmatprep.mubr.bf16.mxu0 0
    %339 = vmatmul.mubr.bf16.gmra.mrb[0].mxu0 %v215
    %v340 = vpop.f32.mrb[0].mxu0
    %v341 = vadd.f32 %v83, %v340
    %v342 = vpop.f32.mrb[0].mxu0
    %v343 = vpop.f32.mrb[0].mxu0
    %v344 = vadd.f32 %v83, %v343
    %v345 = vpop.f32.mrb[0].mxu0
    %346 = vmatprep.mubr.bf16.mxu0 0
    %347 = vmatmul.mubr.bf16.gmra.mrb[0].mxu0 %v218
    %v348 = vpop.f32.mrb[0].mxu0
    %v349 = vadd.f32 %v83, %v348
    %v350 = vpop.f32.mrb[0].mxu0
    %v351 = vpop.f32.mrb[0].mxu0
    %v352 = vadd.f32 %v83, %v351
    %v353 = vpop.f32.mrb[0].mxu0
    %354 = vmatprep.mubr.bf16.mxu0 0
    %355 = vmatmul.mubr.bf16.gmra.mrb[0].mxu0 %v221
    %v356 = vpop.f32.mrb[0].mxu0
    %v357 = vadd.f32 %v83, %v356
    %v358 = vpop.f32.mrb[0].mxu0
    %v359 = vpop.f32.mrb[0].mxu0
    %v360 = vadd.f32 %v83, %v359
    %v361 = vpop.f32.mrb[0].mxu0
    %362 = vmatprep.mubr.bf16.mxu0 0
    %363 = vmatmul.mubr.bf16.gmra.mrb[0].mxu0 %v224
    %v364 = vpop.f32.mrb[0].mxu0
    %v365 = vadd.f32 %v83, %v364
    %v366 = vpop.f32.mrb[0].mxu0
    %v367 = vpop.f32.mrb[0].mxu0
    %v368 = vadd.f32 %v83, %v367
    %v369 = vpop.f32.mrb[0].mxu0
    %370 = vmatprep.mubr.bf16.mxu0 0
    %371 = vmatmul.mubr.bf16.gmra.mrb[0].mxu0 %v227
    %v372 = vpop.f32.mrb[0].mxu0
    %v373 = vadd.f32 %v83, %v372
    %v374 = vpop.f32.mrb[0].mxu0
    %v375 = vpop.f32.mrb[0].mxu0
    %v376 = vadd.f32 %v83, %v375
    %v377 = vpop.f32.mrb[0].mxu0
    %378 = vmatprep.mubr.bf16.mxu0 0
    %379 = vmatmul.mubr.bf16.gmra.mrb[0].mxu0 %v230
    %v380 = vpop.f32.mrb[0].mxu0
    %v381 = vadd.f32 %v83, %v380
    %v382 = vpop.f32.mrb[0].mxu0
    %v383 = vpop.f32.mrb[0].mxu0
    %v384 = vadd.f32 %v83, %v383
    %v385 = vpop.f32.mrb[0].mxu0
    %386 = vmatprep.mubr.bf16.mxu0 0
    %387 = vmatmul.mubr.bf16.gmra.mrb[0].mxu0 %v233
    %v388 = vpop.f32.mrb[0].mxu0
    %v389 = vadd.f32 %v83, %v388
    %v390 = vpop.f32.mrb[0].mxu0
    %v391 = vpop.f32.mrb[0].mxu0
    %v392 = vadd.f32 %v83, %v391
    %v393 = vpop.f32.mrb[0].mxu0
    %394 = vmatprep.mubr.bf16.mxu0 0
    %395 = vmatmul.mubr.bf16.gmra.mrb[0].mxu0 %v236
    %v396 = vpop.f32.mrb[0].mxu0
    %v397 = vadd.f32 %v83, %v396
    %v398 = vpop.f32.mrb[0].mxu0
    %v399 = vpop.f32.mrb[0].mxu0
    %v400 = vadd.f32 %v83, %v399
    %v401 = vpop.f32.mrb[0].mxu0
    %402 = vmatprep.mubr.bf16.mxu0 0
    %403 = vmatmul.mubr.bf16.gmra.mrb[0].mxu0 %v239
    %v404 = vpop.f32.mrb[0].mxu0
    %v405 = vadd.f32 %v83, %v404
    %v406 = vpop.f32.mrb[0].mxu0
    %v407 = vpop.f32.mrb[0].mxu0
    %v408 = vadd.f32 %v83, %v407
    %v409 = vpop.f32.mrb[0].mxu0
    %410 = vmatprep.mubr.bf16.mxu0 0
    %411 = vmatmul.mubr.bf16.gmra.mrb[0].mxu0 %v242
    %v412 = vpop.f32.mrb[0].mxu0
    %v413 = vadd.f32 %v83, %v412
    %v414 = vpop.f32.mrb[0].mxu0
    %v415 = vpop.f32.mrb[0].mxu0
    %v416 = vadd.f32 %v83, %v415
    %v417 = vpop.f32.mrb[0].mxu0
    %418 = vmatprep.mubr.bf16.mxu0 0
    %419 = vmatmul.mubr.bf16.gmra.mrb[0].mxu0 %v245
    %v420 = vpop.f32.mrb[0].mxu0
    %v421 = vadd.f32 %v83, %v420
    %v422 = vpop.f32.mrb[0].mxu0
    %v423 = vpop.f32.mrb[0].mxu0
    %v424 = vadd.f32 %v83, %v423
    %v425 = vpop.f32.mrb[0].mxu0
    %426 = vmatprep.mubr.bf16.mxu0 0
    %427 = vmatmul.mubr.bf16.gmra.mrb[0].mxu0 %v248
    %v428 = vpop.f32.mrb[0].mxu0
    %v429 = vadd.f32 %v83, %v428
    %v430 = vpop.f32.mrb[0].mxu0
    %v431 = vpop.f32.mrb[0].mxu0
    %v432 = vadd.f32 %v83, %v431
    %v433 = vpop.f32.mrb[0].mxu0
    %434 = vdwg.mxu0
    %v435 = vpack.c.bf16 %v288, %v285
    %v436 = vpack.c.bf16 %v296, %v293
    %v437 = vpack.c.bf16 %v304, %v301
    %v438 = vpack.c.bf16 %v312, %v309
    %v439 = vpack.c.bf16 %v320, %v317
    %v440 = vpack.c.bf16 %v328, %v325
    %v441 = vpack.c.bf16 %v336, %v333
    %v442 = vpack.c.bf16 %v344, %v341
    %v443 = vpack.c.bf16 %v352, %v349
    %v444 = vpack.c.bf16 %v360, %v357
    %v445 = vpack.c.bf16 %v368, %v365
    %v446 = vpack.c.bf16 %v376, %v373
    %v447 = vpack.c.bf16 %v384, %v381
    %v448 = vpack.c.bf16 %v392, %v389
    %v449 = vpack.c.bf16 %v400, %v397
    %v450 = vpack.c.bf16 %v408, %v405
    %v451 = vpack.c.bf16 %v416, %v413
    %v452 = vpack.c.bf16 %v424, %v421
    %v453 = vpack.c.bf16 %v432, %v429
    %v454 = vmax.bf16 %v435, 0
    %v455 = vmax.bf16 %v436, 0
    %v456 = vmax.bf16 %v437, 0
    %v457 = vmax.bf16 %v438, 0
    %v458 = vmax.bf16 %v439, 0
    %v459 = vmax.bf16 %v440, 0
    %v460 = vmax.bf16 %v441, 0
    %v461 = vmax.bf16 %v442, 0
    %v462 = vmax.bf16 %v443, 0
    %v463 = vmax.bf16 %v444, 0
    %v464 = vmax.bf16 %v445, 0
    %v465 = vmax.bf16 %v446, 0
    %v466 = vmax.bf16 %v447, 0
    %v467 = vmax.bf16 %v448, 0
    %v468 = vmax.bf16 %v449, 0
    %v469 = vmax.bf16 %v450, 0
    %v470 = vmax.bf16 %v451, 0
    %v471 = vmax.bf16 %v452, 0
    %v472 = vmax.bf16 %v453, 0
    %v473 = vld [vmem:[%s3] sm:$0xf]
    %v474 = vld [vmem:[%s3 + $0x4] sm:$0xf]
    %v475 = vld [vmem:[%s3 + $0x8] sm:$0xf]
    %v476 = vld [vmem:[%s3 + $0xc] sm:$0xf]
    %v477 = vld [vmem:[%s3 + $0x10] sm:$0xf]
    %v478 = vld [vmem:[%s3 + $0x14] sm:$0xf]
    %v479 = vld [vmem:[%s3 + $0x18] sm:$0xf]
    %v480 = vld [vmem:[%s3 + $0x1c] sm:$0xf]
    %v481 = vld [vmem:[%s4] sm:$0x1]
    %v483 = vlaneseq
    %v484 = vshrl.u32 %v483, 7
    %v485 = vsub.s32 0, %v484
    %v486 = vrot.slane %v481, %v485
    %v496 = vunpack.c.l.b16 %v473
    %v497 = vunpack.c.l.b16 %v474
    %v498 = vunpack.c.l.b16 %v475
    %v499 = vunpack.c.l.b16 %v476
    %v500 = vunpack.c.l.b16 %v477
    %v501 = vunpack.c.l.b16 %v478
    %v502 = vunpack.c.l.b16 %v479
    %v503 = vunpack.c.l.b16 %v480
    %v504 = vpack.c.b16 %v497, %v496
    %v505 = vpack.c.b16 %v499, %v498
    %v506 = vpack.c.b16 %v501, %v500
    %v507 = vpack.c.b16 %v503, %v502
    %vm512 = vcmask 523264
    %v514 = vsel %vm512, %v454, 0
    %v517 = vsel %vm512, %v455, 0
    %v520 = vsel %vm512, %v456, 0
    %v523 = vsel %vm512, %v457, 0
    %v526 = vsel %vm512, %v458, 0
    %v529 = vsel %vm512, %v459, 0
    %v532 = vsel %vm512, %v460, 0
    %v535 = vsel %vm512, %v461, 0
    %v538 = vsel %vm512, %v462, 0
    %v541 = vsel %vm512, %v463, 0
    %v544 = vsel %vm512, %v464, 0
    %v547 = vsel %vm512, %v465, 0
    %v550 = vsel %vm512, %v466, 0
    %v553 = vsel %vm512, %v467, 0
    %v556 = vsel %vm512, %v468, 0
    %v559 = vsel %vm512, %v469, 0
    %v562 = vsel %vm512, %v470, 0
    %v565 = vsel %vm512, %v471, 0
    %v568 = vsel %vm512, %v472, 0
    %570 = vmatprep.subr.bf16.mxu0 0
    %571 = vmatpush1.bf16.msra.mxu0 %v504
    %572 = vmatprep.subr.bf16.mxu0 0
    %573 = vmatpush1.bf16.msra.mxu0 %v505
    %574 = vmatprep.subr.bf16.mxu0 0
    %575 = vmatpush1.bf16.msra.mxu0 %v506
    %576 = vmatprep.subr.bf16.mxu0 0
    %577 = vmatpush1.bf16.msra.mxu0 %v507
    %578 = vmatprep.subr.bf16.mxu0 0
    %579 = vmatpush1.bf16.msra.mxu0 0
    %580 = vmatprep.subr.bf16.mxu0 0
    %581 = vmatpush1.bf16.msra.mxu0 0
    %582 = vmatprep.subr.bf16.mxu0 0
    %583 = vmatpush1.bf16.msra.mxu0 0
    %584 = vmatprep.subr.bf16.mxu0 0
    %585 = vmatpush1.bf16.msra.mxu0 0
    %586 = vmatprep.subr.bf16.mxu0 0
    %587 = vmatpush1.bf16.msra.mxu0 0
    %588 = vmatprep.subr.bf16.mxu0 0
    %589 = vmatpush1.bf16.msra.mxu0 0
    %590 = vmatprep.subr.bf16.mxu0 0
    %591 = vmatpush1.bf16.msra.mxu0 0
    %592 = vmatprep.subr.bf16.mxu0 0
    %593 = vmatpush1.bf16.msra.mxu0 0
    %594 = vmatprep.subr.bf16.mxu0 0
    %595 = vmatpush1.bf16.msra.mxu0 0
    %596 = vmatprep.subr.bf16.mxu0 0
    %597 = vmatpush1.bf16.msra.mxu0 0
    %598 = vmatprep.subr.bf16.mxu0 0
    %599 = vmatpush1.bf16.msra.mxu0 0
    %600 = vmatprep.subr.bf16.mxu0 0
    %601 = vmatpush1.bf16.msra.mxu0 0
    %602 = vmatprep.mubr.bf16.mxu0 0
    %603 = vmatmul.mubr.bf16.gmra.mrb[0].mxu0 %v514
    %v604 = vpop.f32.mrb[0].mxu0
    %v605 = vadd.f32 %v486, %v604
    %v606 = vpop.f32.mrb[0].mxu0
    %v607 = vpop.f32.mrb[0].mxu0
    %v608 = vadd.f32 %v486, %v607
    %v609 = vpop.f32.mrb[0].mxu0
    %610 = vmatprep.mubr.bf16.mxu0 0
    %611 = vmatmul.mubr.bf16.gmra.mrb[0].mxu0 %v517
    %v612 = vpop.f32.mrb[0].mxu0
    %v613 = vadd.f32 %v486, %v612
    %v614 = vpop.f32.mrb[0].mxu0
    %v615 = vpop.f32.mrb[0].mxu0
    %v616 = vadd.f32 %v486, %v615
    %v617 = vpop.f32.mrb[0].mxu0
    %618 = vmatprep.mubr.bf16.mxu0 0
    %619 = vmatmul.mubr.bf16.gmra.mrb[0].mxu0 %v520
    %v620 = vpop.f32.mrb[0].mxu0
    %v621 = vadd.f32 %v486, %v620
    %v622 = vpop.f32.mrb[0].mxu0
    %v623 = vpop.f32.mrb[0].mxu0
    %v624 = vadd.f32 %v486, %v623
    %v625 = vpop.f32.mrb[0].mxu0
    %626 = vmatprep.mubr.bf16.mxu0 0
    %627 = vmatmul.mubr.bf16.gmra.mrb[0].mxu0 %v523
    %v628 = vpop.f32.mrb[0].mxu0
    %v629 = vadd.f32 %v486, %v628
    %v630 = vpop.f32.mrb[0].mxu0
    %v631 = vpop.f32.mrb[0].mxu0
    %v632 = vadd.f32 %v486, %v631
    %v633 = vpop.f32.mrb[0].mxu0
    %634 = vmatprep.mubr.bf16.mxu0 0
    %635 = vmatmul.mubr.bf16.gmra.mrb[0].mxu0 %v526
    %v636 = vpop.f32.mrb[0].mxu0
    %v637 = vadd.f32 %v486, %v636
    %v638 = vpop.f32.mrb[0].mxu0
    %v639 = vpop.f32.mrb[0].mxu0
    %v640 = vadd.f32 %v486, %v639
    %v641 = vpop.f32.mrb[0].mxu0
    %642 = vmatprep.mubr.bf16.mxu0 0
    %643 = vmatmul.mubr.bf16.gmra.mrb[0].mxu0 %v529
    %v644 = vpop.f32.mrb[0].mxu0
    %v645 = vadd.f32 %v486, %v644
    %v646 = vpop.f32.mrb[0].mxu0
    %v647 = vpop.f32.mrb[0].mxu0
    %v648 = vadd.f32 %v486, %v647
    %v649 = vpop.f32.mrb[0].mxu0
    %650 = vmatprep.mubr.bf16.mxu0 0
    %651 = vmatmul.mubr.bf16.gmra.mrb[0].mxu0 %v532
    %v652 = vpop.f32.mrb[0].mxu0
    %v653 = vadd.f32 %v486, %v652
    %v654 = vpop.f32.mrb[0].mxu0
    %v655 = vpop.f32.mrb[0].mxu0
    %v656 = vadd.f32 %v486, %v655
    %v657 = vpop.f32.mrb[0].mxu0
    %658 = vmatprep.mubr.bf16.mxu0 0
    %659 = vmatmul.mubr.bf16.gmra.mrb[0].mxu0 %v535
    %v660 = vpop.f32.mrb[0].mxu0
    %v661 = vadd.f32 %v486, %v660
    %v662 = vpop.f32.mrb[0].mxu0
    %v663 = vpop.f32.mrb[0].mxu0
    %v664 = vadd.f32 %v486, %v663
    %v665 = vpop.f32.mrb[0].mxu0
    %666 = vmatprep.mubr.bf16.mxu0 0
    %667 = vmatmul.mubr.bf16.gmra.mrb[0].mxu0 %v538
    %v668 = vpop.f32.mrb[0].mxu0
    %v669 = vadd.f32 %v486, %v668
    %v670 = vpop.f32.mrb[0].mxu0
    %v671 = vpop.f32.mrb[0].mxu0
    %v672 = vadd.f32 %v486, %v671
    %v673 = vpop.f32.mrb[0].mxu0
    %674 = vmatprep.mubr.bf16.mxu0 0
    %675 = vmatmul.mubr.bf16.gmra.mrb[0].mxu0 %v541
    %v676 = vpop.f32.mrb[0].mxu0
    %v677 = vadd.f32 %v486, %v676
    %v678 = vpop.f32.mrb[0].mxu0
    %v679 = vpop.f32.mrb[0].mxu0
    %v680 = vadd.f32 %v486, %v679
    %v681 = vpop.f32.mrb[0].mxu0
    %682 = vmatprep.mubr.bf16.mxu0 0
    %683 = vmatmul.mubr.bf16.gmra.mrb[0].mxu0 %v544
    %v684 = vpop.f32.mrb[0].mxu0
    %v685 = vadd.f32 %v486, %v684
    %v686 = vpop.f32.mrb[0].mxu0
    %v687 = vpop.f32.mrb[0].mxu0
    %v688 = vadd.f32 %v486, %v687
    %v689 = vpop.f32.mrb[0].mxu0
    %690 = vmatprep.mubr.bf16.mxu0 0
    %691 = vmatmul.mubr.bf16.gmra.mrb[0].mxu0 %v547
    %v692 = vpop.f32.mrb[0].mxu0
    %v693 = vadd.f32 %v486, %v692
    %v694 = vpop.f32.mrb[0].mxu0
    %v695 = vpop.f32.mrb[0].mxu0
    %v696 = vadd.f32 %v486, %v695
    %v697 = vpop.f32.mrb[0].mxu0
    %698 = vmatprep.mubr.bf16.mxu0 0
    %699 = vmatmul.mubr.bf16.gmra.mrb[0].mxu0 %v550
    %v700 = vpop.f32.mrb[0].mxu0
    %v701 = vadd.f32 %v486, %v700
    %v702 = vpop.f32.mrb[0].mxu0
    %v703 = vpop.f32.mrb[0].mxu0
    %v704 = vadd.f32 %v486, %v703
    %v705 = vpop.f32.mrb[0].mxu0
    %706 = vmatprep.mubr.bf16.mxu0 0
    %707 = vmatmul.mubr.bf16.gmra.mrb[0].mxu0 %v553
    %v708 = vpop.f32.mrb[0].mxu0
    %v709 = vadd.f32 %v486, %v708
    %v710 = vpop.f32.mrb[0].mxu0
    %v711 = vpop.f32.mrb[0].mxu0
    %v712 = vadd.f32 %v486, %v711
    %v713 = vpop.f32.mrb[0].mxu0
    %714 = vmatprep.mubr.bf16.mxu0 0
    %715 = vmatmul.mubr.bf16.gmra.mrb[0].mxu0 %v556
    %v716 = vpop.f32.mrb[0].mxu0
    %v717 = vadd.f32 %v486, %v716
    %v718 = vpop.f32.mrb[0].mxu0
    %v719 = vpop.f32.mrb[0].mxu0
    %v720 = vadd.f32 %v486, %v719
    %v721 = vpop.f32.mrb[0].mxu0
    %722 = vmatprep.mubr.bf16.mxu0 0
    %723 = vmatmul.mubr.bf16.gmra.mrb[0].mxu0 %v559
    %v724 = vpop.f32.mrb[0].mxu0
    %v725 = vadd.f32 %v486, %v724
    %v726 = vpop.f32.mrb[0].mxu0
    %v727 = vpop.f32.mrb[0].mxu0
    %v728 = vadd.f32 %v486, %v727
    %v729 = vpop.f32.mrb[0].mxu0
    %730 = vmatprep.mubr.bf16.mxu0 0
    %731 = vmatmul.mubr.bf16.gmra.mrb[0].mxu0 %v562
    %v732 = vpop.f32.mrb[0].mxu0
    %v733 = vadd.f32 %v486, %v732
    %v734 = vpop.f32.mrb[0].mxu0
    %v735 = vpop.f32.mrb[0].mxu0
    %v736 = vadd.f32 %v486, %v735
    %v737 = vpop.f32.mrb[0].mxu0
    %738 = vmatprep.mubr.bf16.mxu0 0
    %739 = vmatmul.mubr.bf16.gmra.mrb[0].mxu0 %v565
    %v740 = vpop.f32.mrb[0].mxu0
    %v741 = vadd.f32 %v486, %v740
    %v742 = vpop.f32.mrb[0].mxu0
    %v743 = vpop.f32.mrb[0].mxu0
    %v744 = vadd.f32 %v486, %v743
    %v745 = vpop.f32.mrb[0].mxu0
    %746 = vmatprep.mubr.bf16.mxu0 0
    %747 = vmatmul.mubr.bf16.gmra.mrb[0].mxu0 %v568
    %v748 = vpop.f32.mrb[0].mxu0
    %v749 = vadd.f32 %v486, %v748
    %v750 = vpop.f32.mrb[0].mxu0
    %v751 = vpop.f32.mrb[0].mxu0
    %v752 = vadd.f32 %v486, %v751
    %v753 = vpop.f32.mrb[0].mxu0
    %754 = vdwg.mxu0
    %v755 = vpack.c.bf16 %v608, %v605
    %v756 = vpack.c.bf16 %v616, %v613
    %v757 = vpack.c.bf16 %v624, %v621
    %v758 = vpack.c.bf16 %v632, %v629
    %v759 = vpack.c.bf16 %v640, %v637
    %v760 = vpack.c.bf16 %v648, %v645
    %v761 = vpack.c.bf16 %v656, %v653
    %v762 = vpack.c.bf16 %v664, %v661
    %v763 = vpack.c.bf16 %v672, %v669
    %v764 = vpack.c.bf16 %v680, %v677
    %v765 = vpack.c.bf16 %v688, %v685
    %v766 = vpack.c.bf16 %v696, %v693
    %v767 = vpack.c.bf16 %v704, %v701
    %v768 = vpack.c.bf16 %v712, %v709
    %v769 = vpack.c.bf16 %v720, %v717
    %v770 = vpack.c.bf16 %v728, %v725
    %v771 = vpack.c.bf16 %v736, %v733
    %v772 = vpack.c.bf16 %v744, %v741
    %v773 = vpack.c.bf16 %v752, %v749
    %v774 = vmax.bf16 %v755, 0
    %v775 = vmax.bf16 %v756, 0
    %v776 = vmax.bf16 %v757, 0
    %v777 = vmax.bf16 %v758, 0
    %v778 = vmax.bf16 %v759, 0
    %v779 = vmax.bf16 %v760, 0
    %v780 = vmax.bf16 %v761, 0
    %v781 = vmax.bf16 %v762, 0
    %v782 = vmax.bf16 %v763, 0
    %v783 = vmax.bf16 %v764, 0
    %v784 = vmax.bf16 %v765, 0
    %v785 = vmax.bf16 %v766, 0
    %v786 = vmax.bf16 %v767, 0
    %v787 = vmax.bf16 %v768, 0
    %v788 = vmax.bf16 %v769, 0
    %v789 = vmax.bf16 %v770, 0
    %v790 = vmax.bf16 %v771, 0
    %v791 = vmax.bf16 %v772, 0
    %v792 = vmax.bf16 %v773, 0
    %v793 = vld [vmem:[%s5] sm:$0xf]
    %v794 = vld [vmem:[%s5 + $0x4] sm:$0xf]
    %v795 = vld [vmem:[%s5 + $0x8] sm:$0xf]
    %v796 = vld [vmem:[%s5 + $0xc] sm:$0xf]
    %v797 = vld [vmem:[%s6] sm:$0x1]
    %v799 = vlaneseq
    %v800 = vshrl.u32 %v799, 7
    %v801 = vsub.s32 0, %v800
    %v802 = vrot.slane %v797, %v801
    %v808 = vunpack.c.l.b16 %v793
    %v809 = vunpack.c.l.b16 %v794
    %v810 = vunpack.c.l.b16 %v795
    %v811 = vunpack.c.l.b16 %v796
    %v812 = vpack.c.b16 %v809, %v808
    %v813 = vpack.c.b16 %v811, %v810
    %v817 = vsel %vm192, %v774, 0
    %v820 = vsel %vm192, %v775, 0
    %v823 = vsel %vm192, %v776, 0
    %v826 = vsel %vm192, %v777, 0
    %v829 = vsel %vm192, %v778, 0
    %v832 = vsel %vm192, %v779, 0
    %v835 = vsel %vm192, %v780, 0
    %v838 = vsel %vm192, %v781, 0
    %v841 = vsel %vm192, %v782, 0
    %v844 = vsel %vm192, %v783, 0
    %v847 = vsel %vm192, %v784, 0
    %v850 = vsel %vm192, %v785, 0
    %v853 = vsel %vm192, %v786, 0
    %v856 = vsel %vm192, %v787, 0
    %v859 = vsel %vm192, %v788, 0
    %v862 = vsel %vm192, %v789, 0
    %v865 = vsel %vm192, %v790, 0
    %v868 = vsel %vm192, %v791, 0
    %v871 = vsel %vm192, %v792, 0
    %873 = vmatprep.subr.bf16.mxu0 0
    %874 = vmatpush1.bf16.msra.mxu0 %v812
    %875 = vmatprep.subr.bf16.mxu0 0
    %876 = vmatpush1.bf16.msra.mxu0 %v813
    %877 = vmatprep.subr.bf16.mxu0 0
    %878 = vmatpush1.bf16.msra.mxu0 0
    %879 = vmatprep.subr.bf16.mxu0 0
    %880 = vmatpush1.bf16.msra.mxu0 0
    %881 = vmatprep.subr.bf16.mxu0 0
    %882 = vmatpush1.bf16.msra.mxu0 0
    %883 = vmatprep.subr.bf16.mxu0 0
    %884 = vmatpush1.bf16.msra.mxu0 0
    %885 = vmatprep.subr.bf16.mxu0 0
    %886 = vmatpush1.bf16.msra.mxu0 0
    %887 = vmatprep.subr.bf16.mxu0 0
    %888 = vmatpush1.bf16.msra.mxu0 0
    %889 = vmatprep.subr.bf16.mxu0 0
    %890 = vmatpush1.bf16.msra.mxu0 0
    %891 = vmatprep.subr.bf16.mxu0 0
    %892 = vmatpush1.bf16.msra.mxu0 0
    %893 = vmatprep.subr.bf16.mxu0 0
    %894 = vmatpush1.bf16.msra.mxu0 0
    %895 = vmatprep.subr.bf16.mxu0 0
    %896 = vmatpush1.bf16.msra.mxu0 0
    %897 = vmatprep.subr.bf16.mxu0 0
    %898 = vmatpush1.bf16.msra.mxu0 0
    %899 = vmatprep.subr.bf16.mxu0 0
    %900 = vmatpush1.bf16.msra.mxu0 0
    %901 = vmatprep.subr.bf16.mxu0 0
    %902 = vmatpush1.bf16.msra.mxu0 0
    %903 = vmatprep.subr.bf16.mxu0 0
    %904 = vmatpush1.bf16.msra.mxu0 0
    %905 = vmatprep.mubr.bf16.mxu0 0
    %906 = vmatmul.mubr.bf16.gmra.mrb[0].mxu0 %v817
    %v907 = vpop.f32.mrb[0].mxu0
    %v908 = vadd.f32 %v802, %v907
    %v909 = vpop.f32.mrb[0].mxu0
    %v910 = vpop.f32.mrb[0].mxu0
    %v911 = vadd.f32 %v802, %v910
    %v912 = vpop.f32.mrb[0].mxu0
    %913 = vmatprep.mubr.bf16.mxu0 0
    %914 = vmatmul.mubr.bf16.gmra.mrb[0].mxu0 %v820
    %v915 = vpop.f32.mrb[0].mxu0
    %v916 = vadd.f32 %v802, %v915
    %v917 = vpop.f32.mrb[0].mxu0
    %v918 = vpop.f32.mrb[0].mxu0
    %v919 = vadd.f32 %v802, %v918
    %v920 = vpop.f32.mrb[0].mxu0
    %921 = vmatprep.mubr.bf16.mxu0 0
    %922 = vmatmul.mubr.bf16.gmra.mrb[0].mxu0 %v823
    %v923 = vpop.f32.mrb[0].mxu0
    %v924 = vadd.f32 %v802, %v923
    %v925 = vpop.f32.mrb[0].mxu0
    %v926 = vpop.f32.mrb[0].mxu0
    %v927 = vadd.f32 %v802, %v926
    %v928 = vpop.f32.mrb[0].mxu0
    %929 = vmatprep.mubr.bf16.mxu0 0
    %930 = vmatmul.mubr.bf16.gmra.mrb[0].mxu0 %v826
    %v931 = vpop.f32.mrb[0].mxu0
    %v932 = vadd.f32 %v802, %v931
    %v933 = vpop.f32.mrb[0].mxu0
    %v934 = vpop.f32.mrb[0].mxu0
    %v935 = vadd.f32 %v802, %v934
    %v936 = vpop.f32.mrb[0].mxu0
    %937 = vmatprep.mubr.bf16.mxu0 0
    %938 = vmatmul.mubr.bf16.gmra.mrb[0].mxu0 %v829
    %v939 = vpop.f32.mrb[0].mxu0
    %v940 = vadd.f32 %v802, %v939
    %v941 = vpop.f32.mrb[0].mxu0
    %v942 = vpop.f32.mrb[0].mxu0
    %v943 = vadd.f32 %v802, %v942
    %v944 = vpop.f32.mrb[0].mxu0
    %945 = vmatprep.mubr.bf16.mxu0 0
    %946 = vmatmul.mubr.bf16.gmra.mrb[0].mxu0 %v832
    %v947 = vpop.f32.mrb[0].mxu0
    %v948 = vadd.f32 %v802, %v947
    %v949 = vpop.f32.mrb[0].mxu0
    %v950 = vpop.f32.mrb[0].mxu0
    %v951 = vadd.f32 %v802, %v950
    %v952 = vpop.f32.mrb[0].mxu0
    %953 = vmatprep.mubr.bf16.mxu0 0
    %954 = vmatmul.mubr.bf16.gmra.mrb[0].mxu0 %v835
    %v955 = vpop.f32.mrb[0].mxu0
    %v956 = vadd.f32 %v802, %v955
    %v957 = vpop.f32.mrb[0].mxu0
    %v958 = vpop.f32.mrb[0].mxu0
    %v959 = vadd.f32 %v802, %v958
    %v960 = vpop.f32.mrb[0].mxu0
    %961 = vmatprep.mubr.bf16.mxu0 0
    %962 = vmatmul.mubr.bf16.gmra.mrb[0].mxu0 %v838
    %v963 = vpop.f32.mrb[0].mxu0
    %v964 = vadd.f32 %v802, %v963
    %v965 = vpop.f32.mrb[0].mxu0
    %v966 = vpop.f32.mrb[0].mxu0
    %v967 = vadd.f32 %v802, %v966
    %v968 = vpop.f32.mrb[0].mxu0
    %969 = vmatprep.mubr.bf16.mxu0 0
    %970 = vmatmul.mubr.bf16.gmra.mrb[0].mxu0 %v841
    %v971 = vpop.f32.mrb[0].mxu0
    %v972 = vadd.f32 %v802, %v971
    %v973 = vpop.f32.mrb[0].mxu0
    %v974 = vpop.f32.mrb[0].mxu0
    %v975 = vadd.f32 %v802, %v974
    %v976 = vpop.f32.mrb[0].mxu0
    %977 = vmatprep.mubr.bf16.mxu0 0
    %978 = vmatmul.mubr.bf16.gmra.mrb[0].mxu0 %v844
    %v979 = vpop.f32.mrb[0].mxu0
    %v980 = vadd.f32 %v802, %v979
    %v981 = vpop.f32.mrb[0].mxu0
    %v982 = vpop.f32.mrb[0].mxu0
    %v983 = vadd.f32 %v802, %v982
    %v984 = vpop.f32.mrb[0].mxu0
    %985 = vmatprep.mubr.bf16.mxu0 0
    %986 = vmatmul.mubr.bf16.gmra.mrb[0].mxu0 %v847
    %v987 = vpop.f32.mrb[0].mxu0
    %v988 = vadd.f32 %v802, %v987
    %v989 = vpop.f32.mrb[0].mxu0
    %v990 = vpop.f32.mrb[0].mxu0
    %v991 = vadd.f32 %v802, %v990
    %v992 = vpop.f32.mrb[0].mxu0
    %993 = vmatprep.mubr.bf16.mxu0 0
    %994 = vmatmul.mubr.bf16.gmra.mrb[0].mxu0 %v850
    %v995 = vpop.f32.mrb[0].mxu0
    %v996 = vadd.f32 %v802, %v995
    %v997 = vpop.f32.mrb[0].mxu0
    %v998 = vpop.f32.mrb[0].mxu0
    %v999 = vadd.f32 %v802, %v998
    %v1000 = vpop.f32.mrb[0].mxu0
    %1001 = vmatprep.mubr.bf16.mxu0 0
    %1002 = vmatmul.mubr.bf16.gmra.mrb[0].mxu0 %v853
    %v1003 = vpop.f32.mrb[0].mxu0
    %v1004 = vadd.f32 %v802, %v1003
    %v1005 = vpop.f32.mrb[0].mxu0
    %v1006 = vpop.f32.mrb[0].mxu0
    %v1007 = vadd.f32 %v802, %v1006
    %v1008 = vpop.f32.mrb[0].mxu0
    %1009 = vmatprep.mubr.bf16.mxu0 0
    %1010 = vmatmul.mubr.bf16.gmra.mrb[0].mxu0 %v856
    %v1011 = vpop.f32.mrb[0].mxu0
    %v1012 = vadd.f32 %v802, %v1011
    %v1013 = vpop.f32.mrb[0].mxu0
    %v1014 = vpop.f32.mrb[0].mxu0
    %v1015 = vadd.f32 %v802, %v1014
    %v1016 = vpop.f32.mrb[0].mxu0
    %1017 = vmatprep.mubr.bf16.mxu0 0
    %1018 = vmatmul.mubr.bf16.gmra.mrb[0].mxu0 %v859
    %v1019 = vpop.f32.mrb[0].mxu0
    %v1020 = vadd.f32 %v802, %v1019
    %v1021 = vpop.f32.mrb[0].mxu0
    %v1022 = vpop.f32.mrb[0].mxu0
    %v1023 = vadd.f32 %v802, %v1022
    %v1024 = vpop.f32.mrb[0].mxu0
    %1025 = vmatprep.mubr.bf16.mxu0 0
    %1026 = vmatmul.mubr.bf16.gmra.mrb[0].mxu0 %v862
    %v1027 = vpop.f32.mrb[0].mxu0
    %v1028 = vadd.f32 %v802, %v1027
    %v1029 = vpop.f32.mrb[0].mxu0
    %v1030 = vpop.f32.mrb[0].mxu0
    %v1031 = vadd.f32 %v802, %v1030
    %v1032 = vpop.f32.mrb[0].mxu0
    %1033 = vmatprep.mubr.bf16.mxu0 0
    %1034 = vmatmul.mubr.bf16.gmra.mrb[0].mxu0 %v865
    %v1035 = vpop.f32.mrb[0].mxu0
    %v1036 = vadd.f32 %v802, %v1035
    %v1037 = vpop.f32.mrb[0].mxu0
    %v1038 = vpop.f32.mrb[0].mxu0
    %v1039 = vadd.f32 %v802, %v1038
    %v1040 = vpop.f32.mrb[0].mxu0
    %1041 = vmatprep.mubr.bf16.mxu0 0
    %1042 = vmatmul.mubr.bf16.gmra.mrb[0].mxu0 %v868
    %v1043 = vpop.f32.mrb[0].mxu0
    %v1044 = vadd.f32 %v802, %v1043
    %v1045 = vpop.f32.mrb[0].mxu0
    %v1046 = vpop.f32.mrb[0].mxu0
    %v1047 = vadd.f32 %v802, %v1046
    %v1048 = vpop.f32.mrb[0].mxu0
    %1049 = vmatprep.mubr.bf16.mxu0 0
    %1050 = vmatmul.mubr.bf16.gmra.mrb[0].mxu0 %v871
    %v1051 = vpop.f32.mrb[0].mxu0
    %v1052 = vadd.f32 %v802, %v1051
    %v1053 = vpop.f32.mrb[0].mxu0
    %v1054 = vpop.f32.mrb[0].mxu0
    %v1055 = vadd.f32 %v802, %v1054
    %v1056 = vpop.f32.mrb[0].mxu0
    %1057 = vdwg.mxu0
    %v1058 = vpack.c.bf16 %v911, %v908
    %v1059 = vpack.c.bf16 %v919, %v916
    %v1060 = vpack.c.bf16 %v927, %v924
    %v1061 = vpack.c.bf16 %v935, %v932
    %v1062 = vpack.c.bf16 %v943, %v940
    %v1063 = vpack.c.bf16 %v951, %v948
    %v1064 = vpack.c.bf16 %v959, %v956
    %v1065 = vpack.c.bf16 %v967, %v964
    %v1066 = vpack.c.bf16 %v975, %v972
    %v1067 = vpack.c.bf16 %v983, %v980
    %v1068 = vpack.c.bf16 %v991, %v988
    %v1069 = vpack.c.bf16 %v999, %v996
    %v1070 = vpack.c.bf16 %v1007, %v1004
    %v1071 = vpack.c.bf16 %v1015, %v1012
    %v1072 = vpack.c.bf16 %v1023, %v1020
    %v1073 = vpack.c.bf16 %v1031, %v1028
    %v1074 = vpack.c.bf16 %v1039, %v1036
    %v1075 = vpack.c.bf16 %v1047, %v1044
    %v1076 = vpack.c.bf16 %v1055, %v1052
    %v1077 = vmax.bf16 %v1058, 0
    %v1078 = vmax.bf16 %v1059, 0
    %v1079 = vmax.bf16 %v1060, 0
    %v1080 = vmax.bf16 %v1061, 0
    %v1081 = vmax.bf16 %v1062, 0
    %v1082 = vmax.bf16 %v1063, 0
    %v1083 = vmax.bf16 %v1064, 0
    %v1084 = vmax.bf16 %v1065, 0
    %v1085 = vmax.bf16 %v1066, 0
    %v1086 = vmax.bf16 %v1067, 0
    %v1087 = vmax.bf16 %v1068, 0
    %v1088 = vmax.bf16 %v1069, 0
    %v1089 = vmax.bf16 %v1070, 0
    %v1090 = vmax.bf16 %v1071, 0
    %v1091 = vmax.bf16 %v1072, 0
    %v1092 = vmax.bf16 %v1073, 0
    %v1093 = vmax.bf16 %v1074, 0
    %v1094 = vmax.bf16 %v1075, 0
    %v1095 = vmax.bf16 %v1076, 0
    %v1096 = vld [vmem:[%s7] sm:$0x1]
    %v1097 = vld [vmem:[#allocation2] sm:$0x1]
    %1099 = vset.pattern.permute.xlu0 0
    %1100 = vperm.xlu0 %1099, %v1097
    %v1101 = vpop.permute.xlu0 %1100
    %v1103 = vlaneseq
    %v1104 = vshrl.u32 %v1103, 7
    %v1105 = vsub.s32 0, %v1104
    %v1106 = vrot.slane %v1101, %v1105
    %vm1107 = vcmask 130048
    %v1109 = vsel %vm1107, %v1096, 0
    %v1112 = vsel %vm1107, %v1077, 0
    %v1115 = vsel %vm1107, %v1078, 0
    %v1118 = vsel %vm1107, %v1079, 0
    %v1121 = vsel %vm1107, %v1080, 0
    %v1124 = vsel %vm1107, %v1081, 0
    %v1127 = vsel %vm1107, %v1082, 0
    %v1130 = vsel %vm1107, %v1083, 0
    %v1133 = vsel %vm1107, %v1084, 0
    %v1136 = vsel %vm1107, %v1085, 0
    %v1139 = vsel %vm1107, %v1086, 0
    %v1142 = vsel %vm1107, %v1087, 0
    %v1145 = vsel %vm1107, %v1088, 0
    %v1148 = vsel %vm1107, %v1089, 0
    %v1151 = vsel %vm1107, %v1090, 0
    %v1154 = vsel %vm1107, %v1091, 0
    %v1157 = vsel %vm1107, %v1092, 0
    %v1160 = vsel %vm1107, %v1093, 0
    %v1163 = vsel %vm1107, %v1094, 0
    %v1166 = vsel %vm1107, %v1095, 0
    %1168 = vmatprep.subr.bf16.mxu0 0
    %1169 = vmatpush1.bf16.xpose.msra.mxu0 %v1112
    %1170 = vmatprep.subr.bf16.mxu0 0
    %1171 = vmatpush1.bf16.xpose.msra.mxu0 %v1115
    %1172 = vmatprep.subr.bf16.mxu0 0
    %1173 = vmatpush1.bf16.xpose.msra.mxu0 %v1118
    %1174 = vmatprep.subr.bf16.mxu0 0
    %1175 = vmatpush1.bf16.xpose.msra.mxu0 %v1121
    %1176 = vmatprep.subr.bf16.mxu0 0
    %1177 = vmatpush1.bf16.xpose.msra.mxu0 %v1124
    %1178 = vmatprep.subr.bf16.mxu0 0
    %1179 = vmatpush1.bf16.xpose.msra.mxu0 %v1127
    %1180 = vmatprep.subr.bf16.mxu0 0
    %1181 = vmatpush1.bf16.xpose.msra.mxu0 %v1130
    %1182 = vmatprep.subr.bf16.mxu0 0
    %1183 = vmatpush1.bf16.xpose.msra.mxu0 %v1133
    %1184 = vmatprep.subr.bf16.mxu0 0
    %1185 = vmatpush1.bf16.xpose.msra.mxu0 %v1136
    %1186 = vmatprep.subr.bf16.mxu0 0
    %1187 = vmatpush1.bf16.xpose.msra.mxu0 %v1139
    %1188 = vmatprep.subr.bf16.mxu0 0
    %1189 = vmatpush1.bf16.xpose.msra.mxu0 %v1142
    %1190 = vmatprep.subr.bf16.mxu0 0
    %1191 = vmatpush1.bf16.xpose.msra.mxu0 %v1145
    %1192 = vmatprep.subr.bf16.mxu0 0
    %1193 = vmatpush1.bf16.xpose.msra.mxu0 %v1148
    %1194 = vmatprep.subr.bf16.mxu0 0
    %1195 = vmatpush1.bf16.xpose.msra.mxu0 %v1151
    %1196 = vmatprep.subr.bf16.mxu0 0
    %1197 = vmatpush1.bf16.xpose.msra.mxu0 %v1154
    %1198 = vmatprep.subr.bf16.mxu0 0
    %1199 = vmatpush1.bf16.xpose.msra.mxu0 %v1157
    %1200 = vmatprep.mubr.bf16.mxu0 0
    %1201 = vmatmul.mubr.bf16.gmra.mrb[0].mxu0 %v1109
    %v1202 = vpop.f32.mrb[0].mxu0
    %v1203 = vadd.f32 %v1106, %v1202
    %v1204 = vpop.f32.mrb[0].mxu0
    %v1205 = vadd.f32 %v1106, %v1204
    %v1206 = vpop.f32.mrb[0].mxu0
    %v1207 = vpop.f32.mrb[0].mxu0
    %1208 = vdwg.mxu0
    %1209 = vmatprep.subr.bf16.mxu0 0
    %1210 = vmatpush1.bf16.xpose.msra.mxu0 %v1160
    %1211 = vmatprep.subr.bf16.mxu0 0
    %1212 = vmatpush1.bf16.xpose.msra.mxu0 %v1163
    %1213 = vmatprep.subr.bf16.mxu0 0
    %1214 = vmatpush1.bf16.xpose.msra.mxu0 %v1166
    %1215 = vmatprep.subr.bf16.mxu0 0
    %1216 = vmatpush1.bf16.xpose.msra.mxu0 0
    %1217 = vmatprep.subr.bf16.mxu0 0
    %1218 = vmatpush1.bf16.xpose.msra.mxu0 0
    %1219 = vmatprep.subr.bf16.mxu0 0
    %1220 = vmatpush1.bf16.xpose.msra.mxu0 0
    %1221 = vmatprep.subr.bf16.mxu0 0
    %1222 = vmatpush1.bf16.xpose.msra.mxu0 0
    %1223 = vmatprep.subr.bf16.mxu0 0
    %1224 = vmatpush1.bf16.xpose.msra.mxu0 0
    %1225 = vmatprep.subr.bf16.mxu0 0
    %1226 = vmatpush1.bf16.xpose.msra.mxu0 0
    %1227 = vmatprep.subr.bf16.mxu0 0
    %1228 = vmatpush1.bf16.xpose.msra.mxu0 0
    %1229 = vmatprep.subr.bf16.mxu0 0
    %1230 = vmatpush1.bf16.xpose.msra.mxu0 0
    %1231 = vmatprep.subr.bf16.mxu0 0
    %1232 = vmatpush1.bf16.xpose.msra.mxu0 0
    %1233 = vmatprep.subr.bf16.mxu0 0
    %1234 = vmatpush1.bf16.xpose.msra.mxu0 0
    %1235 = vmatprep.subr.bf16.mxu0 0
    %1236 = vmatpush1.bf16.xpose.msra.mxu0 0
    %1237 = vmatprep.subr.bf16.mxu0 0
    %1238 = vmatpush1.bf16.xpose.msra.mxu0 0
    %1239 = vmatprep.subr.bf16.mxu0 0
    %1240 = vmatpush1.bf16.xpose.msra.mxu0 0
    %1241 = vmatprep.mubr.bf16.mxu0 0
    %1242 = vmatmul.mubr.bf16.gmra.mrb[0].mxu0 %v1109
    %v1243 = vpop.f32.mrb[0].mxu0
    %v1244 = vadd.f32 %v1106, %v1243
    %v1245 = vpop.f32.mrb[0].mxu0
    %v1246 = vpop.f32.mrb[0].mxu0
    %v1247 = vpop.f32.mrb[0].mxu0
    %1248 = vdwg.mxu0
    %v1249 = vxor.u32 %v1203, 2147483648
    %v1250 = vxor.u32 %v1205, 2147483648
    %v1251 = vxor.u32 %v1244, 2147483648
    %v1252 = vmul.f32 %v1249, 1.442695
    %v1253 = vpow.pop %v1252
    %v1254 = vmul.f32 %v1250, 1.442695
    %v1255 = vpow.pop %v1254
    %v1256 = vmul.f32 %v1251, 1.442695
    %v1257 = vpow.pop %v1256
    %v1258 = vadd.f32 %v1253, 1.0
    %v1259 = vadd.f32 %v1255, 1.0
    %v1260 = vadd.f32 %v1257, 1.0
    %v1261 = vrcp.pop %v1258
    %v1262 = vmul.f32 1.0, %v1261
    %v1263 = vrcp.pop %v1259
    %v1264 = vmul.f32 1.0, %v1263
    %v1265 = vrcp.pop %v1260
    %v1266 = vmul.f32 1.0, %v1265
    %v1270 = vcombine.low %v1262, %v1264
    %v1272 = vunpack.c.l.s4 1966171168
    %v1273 = vunpack.c.0.s8 %v1272
    %v1274 = vlaneseq
    %v1275 = vshrl.u32 %v1274, 7
    %v1276 = vsub.s32 %v1273, %v1275
    %v1277 = vrot.slane %v1270, %v1276
    %v1279 = vunpack.c.l.s4 1966171168
    %v1280 = vunpack.c.0.s8 %v1279
    %v1281 = vlaneseq
    %v1282 = vshrl.u32 %v1281, 7
    %v1283 = vsub.s32 %v1280, %v1282
    %v1284 = vrot.slane %v1266, %v1283
    %v1285 = vcombine.low %v1277, %v1284
    %v1287 = vunpack.c.l.s4 1966171168
    %v1288 = vunpack.c.0.s8 %v1287
    %v1289 = vlaneseq
    %v1290 = vshrl.u32 %v1289, 7
    %v1291 = vsub.s32 %v1288, %v1290
    %v1292 = vrot.slane %v1285, %v1291
    %v1294 = vlaneseq
    %vm1295 = vcmp.ge.s32.totalorder %v1294, 0
    %vm1296 = vcmp.lt.s32.totalorder %v1294, 304
    %vm1297 = vmand %vm1295, %vm1296
    %1298 = vst.msk [vmem:[#allocation3] sm:$0x7] %vm1297, %v1292
    // Predicated region
    $region38: #{tpu_custom_call.1} parent=1 // pred_check
      _
    $region39: #{tpu_custom_call.1} parent=1 // pred_check_branch
      %1300 = sbr.rel (0) target = $region41
    $region40: #{tpu_custom_call.1} parent=1 // pred_region
      %s1302 = ssub.s32 48, 48
      %1303 = vsyncadd [#allocation4], %s1302
      %s1305 = sshll.u32 [#allocation3], 4
      %s1306 = int_to_ptr.vmem [resolvable:$true] %s1305
      %1308 = dma.vmem_to_hbm [thread:$0]  %s1306, 48, %s9, [#allocation4]
    $region41: #{tpu_custom_call.1} parent=1 // pred_fallthru
      _
    // Predicated region
    $region42: #{tpu_custom_call.1} parent=1 // pred_check
      _
    $region43: #{tpu_custom_call.1} parent=1 // pred_check_branch
      %1310 = sbr.rel (0) target = $region45
    $region44: #{tpu_custom_call.1} parent=1 // pred_region
      %1311 = dma.done [#allocation4], 48
    $region45: #{tpu_custom_call.1} parent=1 // pred_fallthru
      _
    %1312 = vsyncpa [#allocation4], 1

</llo_original>
